<compile_context>
chip_gen: v7x
topology: tpu7x:2x2x1
jax: 0.10.0
libtpu: 0.0.40
codegen_flags: <defaults>
</compile_context>

<pallas_src>
import jax
import jax.numpy as jnp
from jax import lax
from jax.experimental import pallas as pl
from jax.experimental.pallas import tpu as pltpu


def einsum_gather_kernel(ind_ref, x_ref, w_ref, out_ref):
    # ind_ref: (1, E_TILE*K, 1) int32   (row-major over (e, k))
    # x_ref:   (1, T, I)                (full sequence for batch b; resident across e)
    # w_ref:   (E_TILE, I, J)           (resident across b when E_TILE == E)
    # out_ref: (1, E_TILE, K, J)
    x = x_ref[0]                      # (T, I)
    idx = ind_ref[0]                  # (E_TILE*K, 1)
    t = x.shape[0]
    e_tile = w_ref.shape[0]
    k = out_ref.shape[2]
    ek = e_tile * k

    # Gather-as-matmul, oriented (rows = E_TILE*K, lanes = T):
    #   one_hot[r, t] = (t == idx[r]);  xg[r, :] = X[idx[r], :]
    t_iota = lax.broadcasted_iota(jnp.int32, (ek, t), 1)
    one_hot = (t_iota == idx).astype(x.dtype)                        # (EK, T)
    xg = jnp.dot(one_hot, x, preferred_element_type=jnp.float32)     # (EK, I)

    # Per-expert matmul; E_TILE is a small static constant -> unrolled.
    for e in range(e_tile):
        xg_e = xg[e * k:(e + 1) * k, :].astype(x.dtype)              # (K, I) static slice
        y_e = jnp.dot(xg_e, w_ref[e],
                      preferred_element_type=jnp.float32)            # (K, J)
        out_ref[0, e] = y_e.astype(out_ref.dtype)


def einsum_gather(x, w, ind, *, e_tile=None):
    """x: (B, T, I), w: (E, I, J), ind: (B, E, K) int32 -> (B, E, K, J)."""
    B, T, I = x.shape
    E, I2, J = w.shape
    assert I2 == I
    _, _, K = ind.shape

    if e_tile is None:
        e_tile = E                   # all experts per step; W DMA'd from HBM once
    assert E % e_tile == 0
    if e_tile != E:
        # (8, 128) rule: second-minor dim of the ind block must stay 8-aligned.
        assert (e_tile * K) % 8 == 0
    n_eb = E // e_tile

    # Row-major flatten of (E, K) plus a trailing singleton: the kernel sees the indices
    # as an (E_TILE*K, 1) column vector, the orientation the (EK, T) one-hot needs.
    ind2 = ind.reshape(B, E * K, 1).astype(jnp.int32)

    itemsize = jnp.dtype(x.dtype).itemsize
    flops = 2 * B * E * K * T * I + 2 * B * E * K * I * J
    bytes_accessed = (B * T * I * itemsize + E * I * J * itemsize
                      + B * E * K * 4 + B * E * K * J * itemsize)

    return pl.pallas_call(
        einsum_gather_kernel,
        out_shape=jax.ShapeDtypeStruct((B, E, K, J), x.dtype),
        grid_spec=pltpu.PrefetchScalarGridSpec(
            num_scalar_prefetch=0,
            grid=(B, n_eb),          # b outer, expert-tile inner: X resident across eb
            in_specs=[
                pl.BlockSpec((1, e_tile * K, 1), lambda b, eb: (b, eb, 0)),  # ind
                pl.BlockSpec((1, T, I), lambda b, eb: (b, 0, 0)),            # X
                pl.BlockSpec((e_tile, I, J), lambda b, eb: (eb, 0, 0)),      # W
            ],
            out_specs=pl.BlockSpec((1, e_tile, K, J),
                                   lambda b, eb: (b, eb, 0, 0)),
        ),
        compiler_params=pltpu.CompilerParams(
            dimension_semantics=("parallel", "parallel"),
            vmem_limit_bytes=64 * 1024 * 1024,
        ),
        cost_estimate=pl.CostEstimate(
            flops=flops, transcendentals=0, bytes_accessed=bytes_accessed),
    )(ind2, x, w)


def reference(x, w, ind):
    # Pure-JAX reference mirroring the torch forward exactly.
    y = jnp.einsum('bti,eij->betj', x, w)                   # (B, E, T, J)
    return jnp.take_along_axis(y, ind[..., None], axis=2)   # (B, E, K, J)


if __name__ == "__main__":
    B, T, I, J, E, K = 2, 16, 128, 128, 4, 8
    key = jax.random.PRNGKey(0)
    kx, kw, ki = jax.random.split(key, 3)

    x = jax.random.uniform(kx, (B, T, I), dtype=jnp.float32)
    w = jax.random.uniform(kw, (E, I, J), dtype=jnp.float32)   # torch.rand(E, I, J)
    ind = jax.random.randint(ki, (B, E, K), 0, T, dtype=jnp.int32)

    out = jax.block_until_ready(einsum_gather(x, w, ind))
    ref = reference(x, w, ind)

    assert out.shape == (B, E, K, J)
    assert jnp.allclose(out, ref, atol=1e-4, rtol=1e-4)
    print("KERNEL_OK")
</pallas_src>

<mosaic_0001>
module attributes {stable_mosaic.version = 11 : i64} {
  func.func @einsum_gather_kernel(%arg0: i32, %arg1: i32, %arg2: memref<1x32x1xi32, #tpu.memory_space<vmem>>, %arg3: memref<1x16x128xf32, #tpu.memory_space<vmem>>, %arg4: memref<4x128x128xf32, #tpu.memory_space<vmem>>, %arg5: memref<1x4x8x128xf32, #tpu.memory_space<vmem>>) attributes {dimension_semantics = [#tpu.dimension_semantics<parallel>, #tpu.dimension_semantics<parallel>], iteration_bounds = array<i64: 2, 1>, scalar_prefetch = 0 : i64, scratch_operands = 0 : i64, tpu.core_type = #tpu.core_type<tc>, window_params = [{transform_indices = @transform_0, window_bounds = array<i64: 1, 32, 1>}, {transform_indices = @transform_1, window_bounds = array<i64: 1, 16, 128>}, {transform_indices = @transform_2, window_bounds = array<i64: 4, 128, 128>}, {transform_indices = @transform_3, window_bounds = array<i64: 1, 4, 8, 128>}]} {
    %c0 = arith.constant 0 : index
    %c0_0 = arith.constant 0 : index
    %c0_1 = arith.constant 0 : index
    %0 = vector.load %arg3[%c0, %c0_0, %c0_1] : memref<1x16x128xf32, #tpu.memory_space<vmem>>, vector<1x16x128xf32>
    %1 = vector.shape_cast %0 : vector<1x16x128xf32> to vector<16x128xf32>
    %c0_2 = arith.constant 0 : index
    %c0_3 = arith.constant 0 : index
    %c0_4 = arith.constant 0 : index
    %2 = vector.load %arg2[%c0_2, %c0_3, %c0_4] : memref<1x32x1xi32, #tpu.memory_space<vmem>>, vector<1x32x1xi32>
    %3 = vector.shape_cast %2 : vector<1x32x1xi32> to vector<32x1xi32>
    %4 = tpu.iota {dimensions = array<i32: 1>} : vector<32x16xi32>
    %5 = vector.broadcast %3 : vector<32x1xi32> to vector<32x16xi32>
    %6 = arith.cmpi eq, %4, %5 : vector<32x16xi32>
    %7 = arith.extui %6 : vector<32x16xi1> to vector<32x16xi32>
    %8 = arith.sitofp %7 : vector<32x16xi32> to vector<32x16xf32>
    %cst = arith.constant dense<0.000000e+00> : vector<32x128xf32>
    %9 = tpu.matmul %8, %1, %cst {dimension_numbers = #tpu.dot_dimension_numbers<[1], [0], [0], [1], [0, 0, 1, 1], [], []>} : vector<32x16xf32>, vector<16x128xf32>, vector<32x128xf32> -> vector<32x128xf32>
    %10 = vector.extract_strided_slice %9 {offsets = [0, 0], sizes = [8, 128], strides = [1, 1]} : vector<32x128xf32> to vector<8x128xf32>
    %c0_5 = arith.constant 0 : index
    %c0_6 = arith.constant 0 : index
    %c0_7 = arith.constant 0 : index
    %11 = vector.load %arg4[%c0_5, %c0_6, %c0_7] : memref<4x128x128xf32, #tpu.memory_space<vmem>>, vector<1x128x128xf32>
    %12 = vector.shape_cast %11 : vector<1x128x128xf32> to vector<128x128xf32>
    %cst_8 = arith.constant dense<0.000000e+00> : vector<8x128xf32>
    %13 = tpu.matmul %10, %12, %cst_8 {dimension_numbers = #tpu.dot_dimension_numbers<[1], [0], [0], [1], [0, 0, 1, 1], [], []>} : vector<8x128xf32>, vector<128x128xf32>, vector<8x128xf32> -> vector<8x128xf32>
    %c0_9 = arith.constant 0 : index
    %c0_10 = arith.constant 0 : index
    %c0_11 = arith.constant 0 : index
    %c0_12 = arith.constant 0 : index
    %14 = vector.load %arg5[%c0_9, %c0_10, %c0_11, %c0_12] : memref<1x4x8x128xf32, #tpu.memory_space<vmem>>, vector<1x1x8x128xf32>
    %15 = vector.shape_cast %14 : vector<1x1x8x128xf32> to vector<8x128xf32>
    %16 = vector.shape_cast %13 : vector<8x128xf32> to vector<1x1x8x128xf32>
    tpu.vector_store %arg5[%c0_9, %c0_10, %c0_11, %c0_12], %16 {strides = array<i32>} : memref<1x4x8x128xf32, #tpu.memory_space<vmem>>, vector<1x1x8x128xf32>,
    %17 = vector.extract_strided_slice %9 {offsets = [8, 0], sizes = [8, 128], strides = [1, 1]} : vector<32x128xf32> to vector<8x128xf32>
    %c1 = arith.constant 1 : index
    %c0_13 = arith.constant 0 : index
    %c0_14 = arith.constant 0 : index
    %18 = vector.load %arg4[%c1, %c0_13, %c0_14] : memref<4x128x128xf32, #tpu.memory_space<vmem>>, vector<1x128x128xf32>
    %19 = vector.shape_cast %18 : vector<1x128x128xf32> to vector<128x128xf32>
    %cst_15 = arith.constant dense<0.000000e+00> : vector<8x128xf32>
    %20 = tpu.matmul %17, %19, %cst_15 {dimension_numbers = #tpu.dot_dimension_numbers<[1], [0], [0], [1], [0, 0, 1, 1], [], []>} : vector<8x128xf32>, vector<128x128xf32>, vector<8x128xf32> -> vector<8x128xf32>
    %c0_16 = arith.constant 0 : index
    %c1_17 = arith.constant 1 : index
    %c0_18 = arith.constant 0 : index
    %c0_19 = arith.constant 0 : index
    %21 = vector.load %arg5[%c0_16, %c1_17, %c0_18, %c0_19] : memref<1x4x8x128xf32, #tpu.memory_space<vmem>>, vector<1x1x8x128xf32>
    %22 = vector.shape_cast %21 : vector<1x1x8x128xf32> to vector<8x128xf32>
    %23 = vector.shape_cast %20 : vector<8x128xf32> to vector<1x1x8x128xf32>
    tpu.vector_store %arg5[%c0_16, %c1_17, %c0_18, %c0_19], %23 {strides = array<i32>} : memref<1x4x8x128xf32, #tpu.memory_space<vmem>>, vector<1x1x8x128xf32>,
    %24 = vector.extract_strided_slice %9 {offsets = [16, 0], sizes = [8, 128], strides = [1, 1]} : vector<32x128xf32> to vector<8x128xf32>
    %c2 = arith.constant 2 : index
    %c0_20 = arith.constant 0 : index
    %c0_21 = arith.constant 0 : index
    %25 = vector.load %arg4[%c2, %c0_20, %c0_21] : memref<4x128x128xf32, #tpu.memory_space<vmem>>, vector<1x128x128xf32>
    %26 = vector.shape_cast %25 : vector<1x128x128xf32> to vector<128x128xf32>
    %cst_22 = arith.constant dense<0.000000e+00> : vector<8x128xf32>
    %27 = tpu.matmul %24, %26, %cst_22 {dimension_numbers = #tpu.dot_dimension_numbers<[1], [0], [0], [1], [0, 0, 1, 1], [], []>} : vector<8x128xf32>, vector<128x128xf32>, vector<8x128xf32> -> vector<8x128xf32>
    %c0_23 = arith.constant 0 : index
    %c2_24 = arith.constant 2 : index
    %c0_25 = arith.constant 0 : index
    %c0_26 = arith.constant 0 : index
    %28 = vector.load %arg5[%c0_23, %c2_24, %c0_25, %c0_26] : memref<1x4x8x128xf32, #tpu.memory_space<vmem>>, vector<1x1x8x128xf32>
    %29 = vector.shape_cast %28 : vector<1x1x8x128xf32> to vector<8x128xf32>
    %30 = vector.shape_cast %27 : vector<8x128xf32> to vector<1x1x8x128xf32>
    tpu.vector_store %arg5[%c0_23, %c2_24, %c0_25, %c0_26], %30 {strides = array<i32>} : memref<1x4x8x128xf32, #tpu.memory_space<vmem>>, vector<1x1x8x128xf32>,
    %31 = vector.extract_strided_slice %9 {offsets = [24, 0], sizes = [8, 128], strides = [1, 1]} : vector<32x128xf32> to vector<8x128xf32>
    %c3 = arith.constant 3 : index
    %c0_27 = arith.constant 0 : index
    %c0_28 = arith.constant 0 : index
    %32 = vector.load %arg4[%c3, %c0_27, %c0_28] : memref<4x128x128xf32, #tpu.memory_space<vmem>>, vector<1x128x128xf32>
    %33 = vector.shape_cast %32 : vector<1x128x128xf32> to vector<128x128xf32>
    %cst_29 = arith.constant dense<0.000000e+00> : vector<8x128xf32>
    %34 = tpu.matmul %31, %33, %cst_29 {dimension_numbers = #tpu.dot_dimension_numbers<[1], [0], [0], [1], [0, 0, 1, 1], [], []>} : vector<8x128xf32>, vector<128x128xf32>, vector<8x128xf32> -> vector<8x128xf32>
    %c0_30 = arith.constant 0 : index
    %c3_31 = arith.constant 3 : index
    %c0_32 = arith.constant 0 : index
    %c0_33 = arith.constant 0 : index
    %35 = vector.load %arg5[%c0_30, %c3_31, %c0_32, %c0_33] : memref<1x4x8x128xf32, #tpu.memory_space<vmem>>, vector<1x1x8x128xf32>
    %36 = vector.shape_cast %35 : vector<1x1x8x128xf32> to vector<8x128xf32>
    %37 = vector.shape_cast %34 : vector<8x128xf32> to vector<1x1x8x128xf32>
    tpu.vector_store %arg5[%c0_30, %c3_31, %c0_32, %c0_33], %37 {strides = array<i32>} : memref<1x4x8x128xf32, #tpu.memory_space<vmem>>, vector<1x1x8x128xf32>,
    return
  }
  func.func @transform_0(%arg0: i32, %arg1: i32) -> (i32, i32, i32) {
    %c0_i32 = arith.constant 0 : i32
    %c0_i32_0 = arith.constant 0 : i32
    return %arg0, %arg1, %c0_i32 : i32, i32, i32
  }
  func.func @transform_1(%arg0: i32, %arg1: i32) -> (i32, i32, i32) {
    %c0_i32 = arith.constant 0 : i32
    %c0_i32_0 = arith.constant 0 : i32
    %c0_i32_1 = arith.constant 0 : i32
    return %arg0, %c0_i32, %c0_i32_0 : i32, i32, i32
  }
  func.func @transform_2(%arg0: i32, %arg1: i32) -> (i32, i32, i32) {
    %c0_i32 = arith.constant 0 : i32
    %c0_i32_0 = arith.constant 0 : i32
    %c0_i32_1 = arith.constant 0 : i32
    return %arg1, %c0_i32, %c0_i32_0 : i32, i32, i32
  }
  func.func @transform_3(%arg0: i32, %arg1: i32) -> (i32, i32, i32, i32) {
    %c0_i32 = arith.constant 0 : i32
    %c0_i32_0 = arith.constant 0 : i32
    %c0_i32_1 = arith.constant 0 : i32
    return %arg0, %arg1, %c0_i32, %c0_i32_0 : i32, i32, i32, i32
  }
}

</mosaic_0001>

<llo_original>
// kernel: tpu_custom_call.1
$region0: #{tpu_custom_call.1}
  #allocation0 [shape = 'u32[]', space=smem, size = 0x4, offset = 0x4, fixed_abs, tag = 'smem constant byte address 0x4 - core index']
  #allocation1 [shape = 'u32[144,128]{1,0:T(1,128)}', space=vmem, size = 0x12000, scoped, tag = 'internal scratch']
  %s0 = inlined_call_operand.hbm [shape: s32[2,32,1], index: 0, kind: input, shape index: {}]
  %s1 = inlined_call_operand.hbm [shape: f32[2,16,128], index: 1, kind: input, shape index: {}]
  %s2 = inlined_call_operand.hbm [shape: f32[4,128,128], index: 2, kind: input, shape index: {}]
  %s3 = inlined_call_operand.hbm [shape: f32[2,4,8,128], index: 3, kind: output, shape index: {}]
  %s4 = sld [smem:[#allocation0]]
  $region57: #{tpu_custom_call.1} parent=0
    _
  %s6 = ssub.s32 1, %s4
  %s7 = scalar_select 0, %s6, %s4
  $region1: #{tpu_custom_call.1} parent=0
    #allocation2 [shape = 'u8[32768]{0}', space=vmem, size = 0x8000, scoped, tag = 'input window, operand 0']
    #allocation3 [shape = 's32[2]{0}', space=sflag, size = 0x8, scoped, tag = 'scoped memory for tpu_custom_call.1']
    #allocation4 [shape = 's32[2]{0}', space=sflag, size = 0x8, scoped, tag = 'scoped memory for tpu_custom_call.1']
    #allocation5 [shape = 'u8[16384]{0}', space=vmem, size = 0x4000, scoped, tag = 'input window, operand 1']
    #allocation6 [shape = 's32[2]{0}', space=sflag, size = 0x8, scoped, tag = 'scoped memory for tpu_custom_call.1']
    #allocation7 [shape = 'u8[262144]{0}', space=vmem, size = 0x40000, scoped, tag = 'input window, operand 2, single buffered']
    #allocation8 [shape = 'u8[32768]{0}', space=vmem, size = 0x8000, scoped, tag = 'output window, operand 0']
    %8 = vsyncpa [#allocation3], 0
    %s9 = scalar_lea.sflag [#allocation3], 1
    %10 = vsyncpa %s9, 0
    %11 = vsyncpa [#allocation6], 0
    %s12 = scalar_lea.sflag [#allocation6], 1
    %13 = vsyncpa %s12, 0
    %14 = vsyncpa [#allocation4], 0
    %s15 = scalar_lea.sflag [#allocation4], 1
    %16 = vsyncpa %s15, 0
    loop: start=0, step=1, limit=4
    $region2: #{tpu_custom_call.1} parent=1 // loop_pre_header
      _
    $region3: #{tpu_custom_call.1} parent=1 // loop_header
      %s18 = sphi 0, %s22
      %p19 = scmp.ge.s32.totalorder %s18, 4
      %s25 = sphi 0, %s37
      %s26 = sphi 0, %s33
      %s27 = sphi 0, %s25
      %s28 = sphi 0, %s26
      %s29 = sphi 0, %s27
      %s30 = sphi 0, %s28
      %s42 = sphi 0, %s44
      %s45 = sphi 0, %s42
      %s46 = sphi 0, %s45
      %s62 = sphi 0, %s46
      %s68 = sphi 0, %s70
      %s71 = sphi 0, %s68
      %s72 = sphi 0, %s71
      %s88 = sphi 0, %s72
      %s94 = sphi 0, %s96
      %s97 = sphi 0, %s94
      %s98 = sphi 0, %s97
      %s114 = sphi 0, %s98
      %s122 = sphi 0, %s124
      %s125 = sphi 0, %s122
      %s126 = sphi 0, %s125
      %s142 = sphi 0, %s126
    $region4: #{tpu_custom_call.1} parent=1 // loop_header_branch
      %21 = sbr.rel (%p19) target = $region8
    $region5: #{tpu_custom_call.1} parent=1 // loop_body
      %s23 = ssub.s32 %s18, 1
      %s24 = ssub.s32 %s18, 2
      %s31 = sadd.s32 1, %s26
      %p32 = scmp.ge.s32.totalorder %s31, 1
      %s33 = scalar_select %p32, 0, %s31
      %s34 = sadd.s32 1, %s25
      %s35 = scalar_select %p32, %s34, %s25
      %p36 = scmp.ge.s32.totalorder %s35, 2
      %s37 = scalar_select %p36, 0, %s35
      %s38 = ssub.s32 %s25, %s37
      %s39 = ssub.s32 %s26, %s33
      %s40 = sor.u32 %s38, %s39
      %p41 = scmp.eq.s32.totalorder %s40, 0
      %s43 = sadd.s32 %s42, 1
      %s44 = scalar_select %p41, %s42, %s43
      %p47 = pneg %p41
      %p48 = scmp.eq.s32.totalorder %s18, 1
      %p49 = por %p47, %p48
      %p50 = scmp.ne.s32.totalorder %s42, %s45
      %p51 = scmp.eq.s32.totalorder %s18, 0
      %p52 = por %p50, %p51
      %p53 = scmp.ne.s32.totalorder %s42, %s45
      %p54 = scmp.eq.s32.totalorder %s23, 1
      %p55 = por %p53, %p54
      %p56 = scmp.ne.s32.totalorder %s45, %s46
      %p57 = scmp.eq.s32.totalorder %s23, 0
      %p58 = por %p56, %p57
      %p59 = scmp.ne.s32.totalorder %s45, %s46
      %p60 = scmp.eq.s32.totalorder %s24, 1
      %p61 = por %p59, %p60
      %p63 = scmp.ne.s32.totalorder %s46, %s62
      %p64 = scmp.eq.s32.totalorder %s24, 0
      %p65 = por %p63, %p64
      %s66 = ssub.s32 %s25, %s37
      %p67 = scmp.eq.s32.totalorder %s66, 0
      %s69 = sadd.s32 %s68, 1
      %s70 = scalar_select %p67, %s68, %s69
      %p73 = pneg %p67
      %p74 = scmp.eq.s32.totalorder %s18, 1
      %p75 = por %p73, %p74
      %p76 = scmp.ne.s32.totalorder %s68, %s71
      %p77 = scmp.eq.s32.totalorder %s18, 0
      %p78 = por %p76, %p77
      %p79 = scmp.ne.s32.totalorder %s68, %s71
      %p80 = scmp.eq.s32.totalorder %s23, 1
      %p81 = por %p79, %p80
      %p82 = scmp.ne.s32.totalorder %s71, %s72
      %p83 = scmp.eq.s32.totalorder %s23, 0
      %p84 = por %p82, %p83
      %p85 = scmp.ne.s32.totalorder %s71, %s72
      %p86 = scmp.eq.s32.totalorder %s24, 1
      %p87 = por %p85, %p86
      %p89 = scmp.ne.s32.totalorder %s72, %s88
      %p90 = scmp.eq.s32.totalorder %s24, 0
      %p91 = por %p89, %p90
      %s92 = ssub.s32 %s26, %s33
      %p93 = scmp.eq.s32.totalorder %s92, 0
      %s95 = sadd.s32 %s94, 1
      %s96 = scalar_select %p93, %s94, %s95
      %p99 = pneg %p93
      %p100 = scmp.eq.s32.totalorder %s18, 1
      %p101 = por %p99, %p100
      %p102 = scmp.ne.s32.totalorder %s94, %s97
      %p103 = scmp.eq.s32.totalorder %s18, 0
      %p104 = por %p102, %p103
      %p105 = scmp.ne.s32.totalorder %s94, %s97
      %p106 = scmp.eq.s32.totalorder %s23, 1
      %p107 = por %p105, %p106
      %p108 = scmp.ne.s32.totalorder %s97, %s98
      %p109 = scmp.eq.s32.totalorder %s23, 0
      %p110 = por %p108, %p109
      %p111 = scmp.ne.s32.totalorder %s97, %s98
      %p112 = scmp.eq.s32.totalorder %s24, 1
      %p113 = por %p111, %p112
      %p115 = scmp.ne.s32.totalorder %s98, %s114
      %p116 = scmp.eq.s32.totalorder %s24, 0
      %p117 = por %p115, %p116
      %s118 = ssub.s32 %s25, %s37
      %s119 = ssub.s32 %s26, %s33
      %s120 = sor.u32 %s118, %s119
      %p121 = scmp.eq.s32.totalorder %s120, 0
      %s123 = sadd.s32 %s122, 1
      %s124 = scalar_select %p121, %s122, %s123
      %p127 = pneg %p121
      %p128 = scmp.eq.s32.totalorder %s18, 1
      %p129 = por %p127, %p128
      %p130 = scmp.ne.s32.totalorder %s122, %s125
      %p131 = scmp.eq.s32.totalorder %s18, 0
      %p132 = por %p130, %p131
      %p133 = scmp.ne.s32.totalorder %s122, %s125
      %p134 = scmp.eq.s32.totalorder %s23, 1
      %p135 = por %p133, %p134
      %p136 = scmp.ne.s32.totalorder %s125, %s126
      %p137 = scmp.eq.s32.totalorder %s23, 0
      %p138 = por %p136, %p137
      %p139 = scmp.ne.s32.totalorder %s125, %s126
      %p140 = scmp.eq.s32.totalorder %s24, 1
      %p141 = por %p139, %p140
      %p143 = scmp.ne.s32.totalorder %s126, %s142
      %p144 = scmp.eq.s32.totalorder %s24, 0
      %p145 = por %p143, %p144
      %p146 = scmp.le.s32.totalorder 1, %s18
      %p147 = scmp.lt.s32.totalorder %s18, 3
      %p148 = pnand %p146, %p147
      %p149 = pneg %p148
      // Predicated region
      $region9: #{tpu_custom_call.1} parent=5 // pred_check
        _
      $region10: #{tpu_custom_call.1} parent=5 // pred_check_branch
        %151 = sbr.rel (%p148) target = $region12
      $region11: #{tpu_custom_call.1} parent=5 // pred_region
        %s152 = ssub.s32 %s18, 1
        // Predicated region
        $region13: #{tpu_custom_call.1} parent=11 // pred_check
          %p153 = pneg %p110
        $region14: #{tpu_custom_call.1} parent=11 // pred_check_branch
          %155 = sbr.rel (%p153) target = $region16
        $region15: #{tpu_custom_call.1} parent=11 // pred_region
          %s156 = smul.u32 4, %s28
          %s158 = ssub.s32 8192, 8192
          %159 = vsyncadd [#allocation6], %s158
          %s160 = smul.addr %s156, 16
          %s161 = smul.addr %s160, 128
          %s162 = scalar_lea.hbm %s2, %s161
          %s163 = sshll.u32 [#allocation7], 4
          %s164 = int_to_ptr.vmem [resolvable:$true] %s163
          %169 = dma.hbm_to_vmem [thread:$0]  %s162, 8192, %s164, [#allocation6], 128, 128, 8
        $region16: #{tpu_custom_call.1} parent=11 // pred_fallthru
          _
      $region12: #{tpu_custom_call.1} parent=5 // pred_fallthru
        _
      %p170 = scmp.lt.s32.totalorder %s18, 2
      // Predicated region
      $region17: #{tpu_custom_call.1} parent=5 // pred_check
        %p171 = pneg %p170
      $region18: #{tpu_custom_call.1} parent=5 // pred_check_branch
        %173 = sbr.rel (%p171) target = $region20
      $region19: #{tpu_custom_call.1} parent=5 // pred_region
        // Predicated region
        $region21: #{tpu_custom_call.1} parent=19 // pred_check
          %p174 = pneg %p52
        $region22: #{tpu_custom_call.1} parent=19 // pred_check_branch
          %176 = sbr.rel (%p174) target = $region24
        $region23: #{tpu_custom_call.1} parent=19 // pred_region
          %s177 = sand.u32 %s42, 1
          %s178 = scalar_lea.sflag [#allocation3], %s177
          %s179 = sand.u32 %s42, 1
          %s180 = smul.addr %s179, 32
          %s181 = scalar_lea.vmem [#allocation2], %s180
          %s182 = smul.u32 4, %s26
          %s184 = ssub.s32 512, 512
          %185 = vsyncadd %s178, %s184
          %s186 = smul.addr %s25, 4
          %s187 = sadd.s32 %s182, %s186
          %s188 = smul.addr %s187, 128
          %s189 = scalar_lea.hbm %s0, %s188
          %s190 = sshll.u32 %s181, 4
          %s191 = int_to_ptr.vmem [resolvable:$true] %s190
          %196 = dma.hbm_to_vmem [thread:$0]  %s189, 512, %s191, %s178, 128, 128, 8
        $region24: #{tpu_custom_call.1} parent=19 // pred_fallthru
          _
        // Predicated region
        $region25: #{tpu_custom_call.1} parent=19 // pred_check
          %p197 = pneg %p78
        $region26: #{tpu_custom_call.1} parent=19 // pred_check_branch
          %199 = sbr.rel (%p197) target = $region28
        $region27: #{tpu_custom_call.1} parent=19 // pred_region
          %s200 = sand.u32 %s18, 1
          %s201 = scalar_lea.sflag [#allocation6], %s200
          %s202 = sand.u32 %s68, 1
          %s203 = smul.addr %s202, 16
          %s204 = scalar_lea.vmem [#allocation5], %s203
          %s206 = ssub.s32 256, 256
          %207 = vsyncadd %s201, %s206
          %s208 = smul.addr %s25, 2
          %s209 = smul.addr %s208, 128
          %s210 = scalar_lea.hbm %s1, %s209
          %s211 = sshll.u32 %s204, 4
          %s212 = int_to_ptr.vmem [resolvable:$true] %s211
          %217 = dma.hbm_to_vmem [thread:$0]  %s210, 256, %s212, %s201, 128, 128, 8
        $region28: #{tpu_custom_call.1} parent=19 // pred_fallthru
          _
      $region20: #{tpu_custom_call.1} parent=5 // pred_fallthru
        _
      %p218 = scmp.le.s32.totalorder 1, %s18
      %p219 = scmp.lt.s32.totalorder %s18, 3
      %p220 = pnand %p218, %p219
      %p221 = pneg %p220
      // Predicated region
      $region29: #{tpu_custom_call.1} parent=5 // pred_check
        _
      $region30: #{tpu_custom_call.1} parent=5 // pred_check_branch
        %223 = sbr.rel (%p220) target = $region32
      $region31: #{tpu_custom_call.1} parent=5 // pred_region
        %s224 = ssub.s32 %s18, 1
        %s225 = sand.u32 %s45, 1
        %s226 = scalar_lea.sflag [#allocation3], %s225
        %s227 = sand.u32 %s45, 1
        %s228 = smul.addr %s227, 32
        %s229 = scalar_lea.vmem [#allocation2], %s228
        // Predicated region
        $region33: #{tpu_custom_call.1} parent=31 // pred_check
          %p230 = pneg %p58
        $region34: #{tpu_custom_call.1} parent=31 // pred_check_branch
          %232 = sbr.rel (%p230) target = $region36
        $region35: #{tpu_custom_call.1} parent=31 // pred_region
          %233 = dma.done %s226, 512
        $region36: #{tpu_custom_call.1} parent=31 // pred_fallthru
          _
        %s234 = sand.u32 %s23, 1
        %s235 = scalar_lea.sflag [#allocation6], %s234
        %s236 = sand.u32 %s71, 1
        %s237 = smul.addr %s236, 16
        %s238 = scalar_lea.vmem [#allocation5], %s237
        // Predicated region
        $region37: #{tpu_custom_call.1} parent=31 // pred_check
          %p239 = pneg %p84
        $region38: #{tpu_custom_call.1} parent=31 // pred_check_branch
          %241 = sbr.rel (%p239) target = $region40
        $region39: #{tpu_custom_call.1} parent=31 // pred_region
          %242 = dma.done %s235, 256
        $region40: #{tpu_custom_call.1} parent=31 // pred_fallthru
          _
        // Predicated region
        $region41: #{tpu_custom_call.1} parent=31 // pred_check
          %p243 = pneg %p110
        $region42: #{tpu_custom_call.1} parent=31 // pred_check_branch
          %245 = sbr.rel (%p243) target = $region44
        $region43: #{tpu_custom_call.1} parent=31 // pred_region
          %246 = dma.done [#allocation6], 8192
        $region44: #{tpu_custom_call.1} parent=31 // pred_fallthru
          _
        %s247 = sand.u32 %s45, 1
        %s248 = scalar_lea.sflag [#allocation3], %s247
        %s249 = sand.u32 %s45, 1
        %s250 = smul.addr %s249, 32
        %s251 = scalar_lea.vmem [#allocation2], %s250
        %p252 = pneg %p58
        %p253 = pneg %p55
        %s254 = sand.u32 %s23, 1
        %s255 = scalar_lea.sflag [#allocation6], %s254
        %s256 = sand.u32 %s71, 1
        %s257 = smul.addr %s256, 16
        %s258 = scalar_lea.vmem [#allocation5], %s257
        %p259 = pneg %p84
        %p260 = pneg %p81
        %p261 = pneg %p110
        %p262 = pneg %p107
        %p263 = pneg %p138
        %p264 = pneg %p135
        %s265 = sand.u32 %s125, 1
        %s266 = scalar_lea.sflag [#allocation4], %s265
        %s267 = sand.u32 %s125, 1
        %s268 = smul.addr %s267, 32
        %s269 = scalar_lea.vmem [#allocation8], %s268
        %s270 = smul.u32 4, %s28
        %s271 = smul.u32 4, %s28
        %s272 = smul.u32 4, %s28
        %v273 = vld [vmem:[%s238] sm:$0xff]
        %v274 = vld [vmem:[%s238 + $0x8] sm:$0xff]
        %v275 = vld [vmem:[%s229] sm:$0xff]
        %v276 = vld [vmem:[%s229 + $0x8] sm:$0xff]
        %v277 = vld [vmem:[%s229 + $0x10] sm:$0xff]
        %v278 = vld [vmem:[%s229 + $0x18] sm:$0xff]
        %v279 = vlaneseq
        %v280 = vand.u32 %v279, 127
        %281 = vset.pattern.permute.xlu0 0
        %282 = vperm.xlu0 %281, %v275
        %v283 = vpop.permute.xlu0 %282
        %284 = vset.pattern.permute.xlu0 0
        %285 = vperm.xlu0 %284, %v276
        %v286 = vpop.permute.xlu0 %285
        %287 = vset.pattern.permute.xlu0 0
        %288 = vperm.xlu0 %287, %v277
        %v289 = vpop.permute.xlu0 %288
        %290 = vset.pattern.permute.xlu0 0
        %291 = vperm.xlu0 %290, %v278
        %v292 = vpop.permute.xlu0 %291
        %vm293 = vcmp.eq.s32.totalorder %v280, %v283
        %vm294 = vcmp.eq.s32.totalorder %v280, %v286
        %vm295 = vcmp.eq.s32.totalorder %v280, %v289
        %vm296 = vcmp.eq.s32.totalorder %v280, %v292
        %v297 = vsel %vm293, 1, 0
        %v298 = vsel %vm294, 1, 0
        %v299 = vsel %vm295, 1, 0
        %v300 = vsel %vm296, 1, 0
        %v301 = vcvt.s32.f32 %v297
        %v302 = vcvt.s32.f32 %v298
        %v303 = vcvt.s32.f32 %v299
        %v304 = vcvt.s32.f32 %v300
        %vm305 = vcmask 130048
        %v307 = vsel %vm305, %v301, 0
        %v310 = vsel %vm305, %v302, 0
        %v313 = vsel %vm305, %v303, 0
        %v316 = vsel %vm305, %v304, 0
        %318 = vmatprep.subr.mxu0 0.0
        %319 = vmatpush1.msra.mxu0 %v273
        %320 = vmatprep.subr.mxu0 0.0
        %321 = vmatpush1.msra.mxu0 %v274
        %322 = vmatprep.subr.mxu0 0.0
        %323 = vmatpush1.msra.mxu0 0.0
        %324 = vmatprep.subr.mxu0 0.0
        %325 = vmatpush1.msra.mxu0 0.0
        %326 = vmatprep.subr.mxu0 0.0
        %327 = vmatpush1.msra.mxu0 0.0
        %328 = vmatprep.subr.mxu0 0.0
        %329 = vmatpush1.msra.mxu0 0.0
        %330 = vmatprep.subr.mxu0 0.0
        %331 = vmatpush1.msra.mxu0 0.0
        %332 = vmatprep.subr.mxu0 0.0
        %333 = vmatpush1.msra.mxu0 0.0
        %334 = vmatprep.subr.mxu0 0.0
        %335 = vmatpush1.msra.mxu0 0.0
        %336 = vmatprep.subr.mxu0 0.0
        %337 = vmatpush1.msra.mxu0 0.0
        %338 = vmatprep.subr.mxu0 0.0
        %339 = vmatpush1.msra.mxu0 0.0
        %340 = vmatprep.subr.mxu0 0.0
        %341 = vmatpush1.msra.mxu0 0.0
        %342 = vmatprep.subr.mxu0 0.0
        %343 = vmatpush1.msra.mxu0 0.0
        %344 = vmatprep.subr.mxu0 0.0
        %345 = vmatpush1.msra.mxu0 0.0
        %346 = vmatprep.subr.mxu0 0.0
        %347 = vmatpush1.msra.mxu0 0.0
        %348 = vmatprep.subr.mxu0 0.0
        %349 = vmatpush1.msra.mxu0 0.0
        %350 = vmatprep.subr.mxu0 0.0
        %351 = vmatpush1.msra.mxu0 0.0
        %352 = vmatprep.subr.mxu0 0.0
        %353 = vmatpush1.msra.mxu0 0.0
        %354 = vmatprep.subr.mxu0 0.0
        %355 = vmatpush1.msra.mxu0 0.0
        %356 = vmatprep.subr.mxu0 0.0
        %357 = vmatpush1.msra.mxu0 0.0
        %358 = vmatprep.subr.mxu0 0.0
        %359 = vmatpush1.msra.mxu0 0.0
        %360 = vmatprep.subr.mxu0 0.0
        %361 = vmatpush1.msra.mxu0 0.0
        %362 = vmatprep.subr.mxu0 0.0
        %363 = vmatpush1.msra.mxu0 0.0
        %364 = vmatprep.subr.mxu0 0.0
        %365 = vmatpush1.msra.mxu0 0.0
        %366 = vmatprep.subr.mxu0 0.0
        %367 = vmatpush1.msra.mxu0 0.0
        %368 = vmatprep.subr.mxu0 0.0
        %369 = vmatpush1.msra.mxu0 0.0
        %370 = vmatprep.subr.mxu0 0.0
        %371 = vmatpush1.msra.mxu0 0.0
        %372 = vmatprep.subr.mxu0 0.0
        %373 = vmatpush1.msra.mxu0 0.0
        %374 = vmatprep.subr.mxu0 0.0
        %375 = vmatpush1.msra.mxu0 0.0
        %376 = vmatprep.subr.mxu0 0.0
        %377 = vmatpush1.msra.mxu0 0.0
        %378 = vmatprep.subr.mxu0 0.0
        %379 = vmatpush1.msra.mxu0 0.0
        %380 = vmatprep.subr.mxu0 0.0
        %381 = vmatpush1.msra.mxu0 0.0
        %382 = vmatprep.mubr.f32.mxu0 0.0
        %383 = vmatmul.mubr.f32.gmra.mrb[0].mxu0 %v307
        %v384 = vpop.f32.mrb[0].mxu0
        %v385 = vadd.f32 0.0, %v384
        %v386 = vpop.f32.mrb[0].mxu0
        %387 = vmatprep.mubr.f32.mxu0 0.0
        %388 = vmatmul.mubr.f32.gmra.mrb[0].mxu0 %v310
        %v389 = vpop.f32.mrb[0].mxu0
        %v390 = vadd.f32 0.0, %v389
        %v391 = vpop.f32.mrb[0].mxu0
        %392 = vmatprep.mubr.f32.mxu0 0.0
        %393 = vmatmul.mubr.f32.gmra.mrb[0].mxu0 %v313
        %v394 = vpop.f32.mrb[0].mxu0
        %v395 = vadd.f32 0.0, %v394
        %v396 = vpop.f32.mrb[0].mxu0
        %397 = vmatprep.mubr.f32.mxu0 0.0
        %398 = vmatmul.mubr.f32.gmra.mrb[0].mxu0 %v316
        %v399 = vpop.f32.mrb[0].mxu0
        %v400 = vadd.f32 0.0, %v399
        %v401 = vpop.f32.mrb[0].mxu0
        %402 = vdwg.mxu0
        %v403 = vld [vmem:[#allocation7] sm:$0xff]
        %v404 = vld [vmem:[#allocation7 + $0x8] sm:$0xff]
        %v405 = vld [vmem:[#allocation7 + $0x10] sm:$0xff]
        %v406 = vld [vmem:[#allocation7 + $0x18] sm:$0xff]
        %v407 = vld [vmem:[#allocation7 + $0x20] sm:$0xff]
        %v408 = vld [vmem:[#allocation7 + $0x28] sm:$0xff]
        %v409 = vld [vmem:[#allocation7 + $0x30] sm:$0xff]
        %v410 = vld [vmem:[#allocation7 + $0x38] sm:$0xff]
        %v411 = vld [vmem:[#allocation7 + $0x40] sm:$0xff]
        %v412 = vld [vmem:[#allocation7 + $0x48] sm:$0xff]
        %v413 = vld [vmem:[#allocation7 + $0x50] sm:$0xff]
        %v414 = vld [vmem:[#allocation7 + $0x58] sm:$0xff]
        %v415 = vld [vmem:[#allocation7 + $0x60] sm:$0xff]
        %v416 = vld [vmem:[#allocation7 + $0x68] sm:$0xff]
        %v417 = vld [vmem:[#allocation7 + $0x70] sm:$0xff]
        %v418 = vld [vmem:[#allocation7 + $0x78] sm:$0xff]
        %419 = vmatprep.subr.mxu0 0.0
        %420 = vmatpush1.msra.mxu0 %v403
        %421 = vmatprep.subr.mxu0 0.0
        %422 = vmatpush1.msra.mxu0 %v404
        %423 = vmatprep.subr.mxu0 0.0
        %424 = vmatpush1.msra.mxu0 %v405
        %425 = vmatprep.subr.mxu0 0.0
        %426 = vmatpush1.msra.mxu0 %v406
        %427 = vmatprep.subr.mxu0 0.0
        %428 = vmatpush1.msra.mxu0 %v407
        %429 = vmatprep.subr.mxu0 0.0
        %430 = vmatpush1.msra.mxu0 %v408
        %431 = vmatprep.subr.mxu0 0.0
        %432 = vmatpush1.msra.mxu0 %v409
        %433 = vmatprep.subr.mxu0 0.0
        %434 = vmatpush1.msra.mxu0 %v410
        %435 = vmatprep.subr.mxu0 0.0
        %436 = vmatpush1.msra.mxu0 %v411
        %437 = vmatprep.subr.mxu0 0.0
        %438 = vmatpush1.msra.mxu0 %v412
        %439 = vmatprep.subr.mxu0 0.0
        %440 = vmatpush1.msra.mxu0 %v413
        %441 = vmatprep.subr.mxu0 0.0
        %442 = vmatpush1.msra.mxu0 %v414
        %443 = vmatprep.subr.mxu0 0.0
        %444 = vmatpush1.msra.mxu0 %v415
        %445 = vmatprep.subr.mxu0 0.0
        %446 = vmatpush1.msra.mxu0 %v416
        %447 = vmatprep.subr.mxu0 0.0
        %448 = vmatpush1.msra.mxu0 %v417
        %449 = vmatprep.subr.mxu0 0.0
        %450 = vmatpush1.msra.mxu0 %v418
        %451 = vmatprep.subr.mxu0 0.0
        %452 = vmatpush1.msra.mxu0 0.0
        %453 = vmatprep.subr.mxu0 0.0
        %454 = vmatpush1.msra.mxu0 0.0
        %455 = vmatprep.subr.mxu0 0.0
        %456 = vmatpush1.msra.mxu0 0.0
        %457 = vmatprep.subr.mxu0 0.0
        %458 = vmatpush1.msra.mxu0 0.0
        %459 = vmatprep.subr.mxu0 0.0
        %460 = vmatpush1.msra.mxu0 0.0
        %461 = vmatprep.subr.mxu0 0.0
        %462 = vmatpush1.msra.mxu0 0.0
        %463 = vmatprep.subr.mxu0 0.0
        %464 = vmatpush1.msra.mxu0 0.0
        %465 = vmatprep.subr.mxu0 0.0
        %466 = vmatpush1.msra.mxu0 0.0
        %467 = vmatprep.subr.mxu0 0.0
        %468 = vmatpush1.msra.mxu0 0.0
        %469 = vmatprep.subr.mxu0 0.0
        %470 = vmatpush1.msra.mxu0 0.0
        %471 = vmatprep.subr.mxu0 0.0
        %472 = vmatpush1.msra.mxu0 0.0
        %473 = vmatprep.subr.mxu0 0.0
        %474 = vmatpush1.msra.mxu0 0.0
        %475 = vmatprep.subr.mxu0 0.0
        %476 = vmatpush1.msra.mxu0 0.0
        %477 = vmatprep.subr.mxu0 0.0
        %478 = vmatpush1.msra.mxu0 0.0
        %479 = vmatprep.subr.mxu0 0.0
        %480 = vmatpush1.msra.mxu0 0.0
        %481 = vmatprep.subr.mxu0 0.0
        %482 = vmatpush1.msra.mxu0 0.0
        %483 = vmatprep.mubr.f32.mxu0 0.0
        %484 = vmatmul.mubr.f32.gmra.mrb[0].mxu0 %v385
        %v485 = vpop.f32.mrb[0].mxu0
        %v486 = vadd.f32 0.0, %v485
        %v487 = vpop.f32.mrb[0].mxu0
        %488 = vdwg.mxu0
        %489 = vst [vmem:[%s269] sm:$0xff] %v486
        %s490 = scalar_lea.vmem [#allocation7], 128
        %v491 = vld [vmem:[%s490] sm:$0xff]
        %v492 = vld [vmem:[%s490 + $0x8] sm:$0xff]
        %v493 = vld [vmem:[%s490 + $0x10] sm:$0xff]
        %v494 = vld [vmem:[%s490 + $0x18] sm:$0xff]
        %v495 = vld [vmem:[%s490 + $0x20] sm:$0xff]
        %v496 = vld [vmem:[%s490 + $0x28] sm:$0xff]
        %v497 = vld [vmem:[%s490 + $0x30] sm:$0xff]
        %v498 = vld [vmem:[%s490 + $0x38] sm:$0xff]
        %v499 = vld [vmem:[%s490 + $0x40] sm:$0xff]
        %v500 = vld [vmem:[%s490 + $0x48] sm:$0xff]
        %v501 = vld [vmem:[%s490 + $0x50] sm:$0xff]
        %v502 = vld [vmem:[%s490 + $0x58] sm:$0xff]
        %v503 = vld [vmem:[%s490 + $0x60] sm:$0xff]
        %v504 = vld [vmem:[%s490 + $0x68] sm:$0xff]
        %v505 = vld [vmem:[%s490 + $0x70] sm:$0xff]
        %v506 = vld [vmem:[%s490 + $0x78] sm:$0xff]
        %507 = vmatprep.subr.mxu0 0.0
        %508 = vmatpush1.msra.mxu0 %v491
        %509 = vmatprep.subr.mxu0 0.0
        %510 = vmatpush1.msra.mxu0 %v492
        %511 = vmatprep.subr.mxu0 0.0
        %512 = vmatpush1.msra.mxu0 %v493
        %513 = vmatprep.subr.mxu0 0.0
        %514 = vmatpush1.msra.mxu0 %v494
        %515 = vmatprep.subr.mxu0 0.0
        %516 = vmatpush1.msra.mxu0 %v495
        %517 = vmatprep.subr.mxu0 0.0
        %518 = vmatpush1.msra.mxu0 %v496
        %519 = vmatprep.subr.mxu0 0.0
        %520 = vmatpush1.msra.mxu0 %v497
        %521 = vmatprep.subr.mxu0 0.0
        %522 = vmatpush1.msra.mxu0 %v498
        %523 = vmatprep.subr.mxu0 0.0
        %524 = vmatpush1.msra.mxu0 %v499
        %525 = vmatprep.subr.mxu0 0.0
        %526 = vmatpush1.msra.mxu0 %v500
        %527 = vmatprep.subr.mxu0 0.0
        %528 = vmatpush1.msra.mxu0 %v501
        %529 = vmatprep.subr.mxu0 0.0
        %530 = vmatpush1.msra.mxu0 %v502
        %531 = vmatprep.subr.mxu0 0.0
        %532 = vmatpush1.msra.mxu0 %v503
        %533 = vmatprep.subr.mxu0 0.0
        %534 = vmatpush1.msra.mxu0 %v504
        %535 = vmatprep.subr.mxu0 0.0
        %536 = vmatpush1.msra.mxu0 %v505
        %537 = vmatprep.subr.mxu0 0.0
        %538 = vmatpush1.msra.mxu0 %v506
        %539 = vmatprep.subr.mxu0 0.0
        %540 = vmatpush1.msra.mxu0 0.0
        %541 = vmatprep.subr.mxu0 0.0
        %542 = vmatpush1.msra.mxu0 0.0
        %543 = vmatprep.subr.mxu0 0.0
        %544 = vmatpush1.msra.mxu0 0.0
        %545 = vmatprep.subr.mxu0 0.0
        %546 = vmatpush1.msra.mxu0 0.0
        %547 = vmatprep.subr.mxu0 0.0
        %548 = vmatpush1.msra.mxu0 0.0
        %549 = vmatprep.subr.mxu0 0.0
        %550 = vmatpush1.msra.mxu0 0.0
        %551 = vmatprep.subr.mxu0 0.0
        %552 = vmatpush1.msra.mxu0 0.0
        %553 = vmatprep.subr.mxu0 0.0
        %554 = vmatpush1.msra.mxu0 0.0
        %555 = vmatprep.subr.mxu0 0.0
        %556 = vmatpush1.msra.mxu0 0.0
        %557 = vmatprep.subr.mxu0 0.0
        %558 = vmatpush1.msra.mxu0 0.0
        %559 = vmatprep.subr.mxu0 0.0
        %560 = vmatpush1.msra.mxu0 0.0
        %561 = vmatprep.subr.mxu0 0.0
        %562 = vmatpush1.msra.mxu0 0.0
        %563 = vmatprep.subr.mxu0 0.0
        %564 = vmatpush1.msra.mxu0 0.0
        %565 = vmatprep.subr.mxu0 0.0
        %566 = vmatpush1.msra.mxu0 0.0
        %567 = vmatprep.subr.mxu0 0.0
        %568 = vmatpush1.msra.mxu0 0.0
        %569 = vmatprep.subr.mxu0 0.0
        %570 = vmatpush1.msra.mxu0 0.0
        %571 = vmatprep.mubr.f32.mxu0 0.0
        %572 = vmatmul.mubr.f32.gmra.mrb[0].mxu0 %v390
        %v573 = vpop.f32.mrb[0].mxu0
        %v574 = vadd.f32 0.0, %v573
        %v575 = vpop.f32.mrb[0].mxu0
        %576 = vdwg.mxu0
        %s577 = scalar_lea.vmem %s269, 8 [#allocation8]
        %578 = vst [vmem:[%s577] sm:$0xff] %v574
        %s579 = scalar_lea.vmem [#allocation7], 256
        %v580 = vld [vmem:[%s579] sm:$0xff]
        %v581 = vld [vmem:[%s579 + $0x8] sm:$0xff]
        %v582 = vld [vmem:[%s579 + $0x10] sm:$0xff]
        %v583 = vld [vmem:[%s579 + $0x18] sm:$0xff]
        %v584 = vld [vmem:[%s579 + $0x20] sm:$0xff]
        %v585 = vld [vmem:[%s579 + $0x28] sm:$0xff]
        %v586 = vld [vmem:[%s579 + $0x30] sm:$0xff]
        %v587 = vld [vmem:[%s579 + $0x38] sm:$0xff]
        %v588 = vld [vmem:[%s579 + $0x40] sm:$0xff]
        %v589 = vld [vmem:[%s579 + $0x48] sm:$0xff]
        %v590 = vld [vmem:[%s579 + $0x50] sm:$0xff]
        %v591 = vld [vmem:[%s579 + $0x58] sm:$0xff]
        %v592 = vld [vmem:[%s579 + $0x60] sm:$0xff]
        %v593 = vld [vmem:[%s579 + $0x68] sm:$0xff]
        %v594 = vld [vmem:[%s579 + $0x70] sm:$0xff]
        %v595 = vld [vmem:[%s579 + $0x78] sm:$0xff]
        %596 = vmatprep.subr.mxu0 0.0
        %597 = vmatpush1.msra.mxu0 %v580
        %598 = vmatprep.subr.mxu0 0.0
        %599 = vmatpush1.msra.mxu0 %v581
        %600 = vmatprep.subr.mxu0 0.0
        %601 = vmatpush1.msra.mxu0 %v582
        %602 = vmatprep.subr.mxu0 0.0
        %603 = vmatpush1.msra.mxu0 %v583
        %604 = vmatprep.subr.mxu0 0.0
        %605 = vmatpush1.msra.mxu0 %v584
        %606 = vmatprep.subr.mxu0 0.0
        %607 = vmatpush1.msra.mxu0 %v585
        %608 = vmatprep.subr.mxu0 0.0
        %609 = vmatpush1.msra.mxu0 %v586
        %610 = vmatprep.subr.mxu0 0.0
        %611 = vmatpush1.msra.mxu0 %v587
        %612 = vmatprep.subr.mxu0 0.0
        %613 = vmatpush1.msra.mxu0 %v588
        %614 = vmatprep.subr.mxu0 0.0
        %615 = vmatpush1.msra.mxu0 %v589
        %616 = vmatprep.subr.mxu0 0.0
        %617 = vmatpush1.msra.mxu0 %v590
        %618 = vmatprep.subr.mxu0 0.0
        %619 = vmatpush1.msra.mxu0 %v591
        %620 = vmatprep.subr.mxu0 0.0
        %621 = vmatpush1.msra.mxu0 %v592
        %622 = vmatprep.subr.mxu0 0.0
        %623 = vmatpush1.msra.mxu0 %v593
        %624 = vmatprep.subr.mxu0 0.0
        %625 = vmatpush1.msra.mxu0 %v594
        %626 = vmatprep.subr.mxu0 0.0
        %627 = vmatpush1.msra.mxu0 %v595
        %628 = vmatprep.subr.mxu0 0.0
        %629 = vmatpush1.msra.mxu0 0.0
        %630 = vmatprep.subr.mxu0 0.0
        %631 = vmatpush1.msra.mxu0 0.0
        %632 = vmatprep.subr.mxu0 0.0
        %633 = vmatpush1.msra.mxu0 0.0
        %634 = vmatprep.subr.mxu0 0.0
        %635 = vmatpush1.msra.mxu0 0.0
        %636 = vmatprep.subr.mxu0 0.0
        %637 = vmatpush1.msra.mxu0 0.0
        %638 = vmatprep.subr.mxu0 0.0
        %639 = vmatpush1.msra.mxu0 0.0
        %640 = vmatprep.subr.mxu0 0.0
        %641 = vmatpush1.msra.mxu0 0.0
        %642 = vmatprep.subr.mxu0 0.0
        %643 = vmatpush1.msra.mxu0 0.0
        %644 = vmatprep.subr.mxu0 0.0
        %645 = vmatpush1.msra.mxu0 0.0
        %646 = vmatprep.subr.mxu0 0.0
        %647 = vmatpush1.msra.mxu0 0.0
        %648 = vmatprep.subr.mxu0 0.0
        %649 = vmatpush1.msra.mxu0 0.0
        %650 = vmatprep.subr.mxu0 0.0
        %651 = vmatpush1.msra.mxu0 0.0
        %652 = vmatprep.subr.mxu0 0.0
        %653 = vmatpush1.msra.mxu0 0.0
        %654 = vmatprep.subr.mxu0 0.0
        %655 = vmatpush1.msra.mxu0 0.0
        %656 = vmatprep.subr.mxu0 0.0
        %657 = vmatpush1.msra.mxu0 0.0
        %658 = vmatprep.subr.mxu0 0.0
        %659 = vmatpush1.msra.mxu0 0.0
        %660 = vmatprep.mubr.f32.mxu0 0.0
        %661 = vmatmul.mubr.f32.gmra.mrb[0].mxu0 %v395
        %v662 = vpop.f32.mrb[0].mxu0
        %v663 = vadd.f32 0.0, %v662
        %v664 = vpop.f32.mrb[0].mxu0
        %665 = vdwg.mxu0
        %s666 = scalar_lea.vmem %s269, 16 [#allocation8]
        %667 = vst [vmem:[%s666] sm:$0xff] %v663
        %s668 = scalar_lea.vmem [#allocation7], 384
        %v669 = vld [vmem:[%s668] sm:$0xff]
        %v670 = vld [vmem:[%s668 + $0x8] sm:$0xff]
        %v671 = vld [vmem:[%s668 + $0x10] sm:$0xff]
        %v672 = vld [vmem:[%s668 + $0x18] sm:$0xff]
        %v673 = vld [vmem:[%s668 + $0x20] sm:$0xff]
        %v674 = vld [vmem:[%s668 + $0x28] sm:$0xff]
        %v675 = vld [vmem:[%s668 + $0x30] sm:$0xff]
        %v676 = vld [vmem:[%s668 + $0x38] sm:$0xff]
        %v677 = vld [vmem:[%s668 + $0x40] sm:$0xff]
        %v678 = vld [vmem:[%s668 + $0x48] sm:$0xff]
        %v679 = vld [vmem:[%s668 + $0x50] sm:$0xff]
        %v680 = vld [vmem:[%s668 + $0x58] sm:$0xff]
        %v681 = vld [vmem:[%s668 + $0x60] sm:$0xff]
        %v682 = vld [vmem:[%s668 + $0x68] sm:$0xff]
        %v683 = vld [vmem:[%s668 + $0x70] sm:$0xff]
        %v684 = vld [vmem:[%s668 + $0x78] sm:$0xff]
        %685 = vmatprep.subr.mxu0 0.0
        %686 = vmatpush1.msra.mxu0 %v669
        %687 = vmatprep.subr.mxu0 0.0
        %688 = vmatpush1.msra.mxu0 %v670
        %689 = vmatprep.subr.mxu0 0.0
        %690 = vmatpush1.msra.mxu0 %v671
        %691 = vmatprep.subr.mxu0 0.0
        %692 = vmatpush1.msra.mxu0 %v672
        %693 = vmatprep.subr.mxu0 0.0
        %694 = vmatpush1.msra.mxu0 %v673
        %695 = vmatprep.subr.mxu0 0.0
        %696 = vmatpush1.msra.mxu0 %v674
        %697 = vmatprep.subr.mxu0 0.0
        %698 = vmatpush1.msra.mxu0 %v675
        %699 = vmatprep.subr.mxu0 0.0
        %700 = vmatpush1.msra.mxu0 %v676
        %701 = vmatprep.subr.mxu0 0.0
        %702 = vmatpush1.msra.mxu0 %v677
        %703 = vmatprep.subr.mxu0 0.0
        %704 = vmatpush1.msra.mxu0 %v678
        %705 = vmatprep.subr.mxu0 0.0
        %706 = vmatpush1.msra.mxu0 %v679
        %707 = vmatprep.subr.mxu0 0.0
        %708 = vmatpush1.msra.mxu0 %v680
        %709 = vmatprep.subr.mxu0 0.0
        %710 = vmatpush1.msra.mxu0 %v681
        %711 = vmatprep.subr.mxu0 0.0
        %712 = vmatpush1.msra.mxu0 %v682
        %713 = vmatprep.subr.mxu0 0.0
        %714 = vmatpush1.msra.mxu0 %v683
        %715 = vmatprep.subr.mxu0 0.0
        %716 = vmatpush1.msra.mxu0 %v684
        %717 = vmatprep.subr.mxu0 0.0
        %718 = vmatpush1.msra.mxu0 0.0
        %719 = vmatprep.subr.mxu0 0.0
        %720 = vmatpush1.msra.mxu0 0.0
        %721 = vmatprep.subr.mxu0 0.0
        %722 = vmatpush1.msra.mxu0 0.0
        %723 = vmatprep.subr.mxu0 0.0
        %724 = vmatpush1.msra.mxu0 0.0
        %725 = vmatprep.subr.mxu0 0.0
        %726 = vmatpush1.msra.mxu0 0.0
        %727 = vmatprep.subr.mxu0 0.0
        %728 = vmatpush1.msra.mxu0 0.0
        %729 = vmatprep.subr.mxu0 0.0
        %730 = vmatpush1.msra.mxu0 0.0
        %731 = vmatprep.subr.mxu0 0.0
        %732 = vmatpush1.msra.mxu0 0.0
        %733 = vmatprep.subr.mxu0 0.0
        %734 = vmatpush1.msra.mxu0 0.0
        %735 = vmatprep.subr.mxu0 0.0
        %736 = vmatpush1.msra.mxu0 0.0
        %737 = vmatprep.subr.mxu0 0.0
        %738 = vmatpush1.msra.mxu0 0.0
        %739 = vmatprep.subr.mxu0 0.0
        %740 = vmatpush1.msra.mxu0 0.0
        %741 = vmatprep.subr.mxu0 0.0
        %742 = vmatpush1.msra.mxu0 0.0
        %743 = vmatprep.subr.mxu0 0.0
        %744 = vmatpush1.msra.mxu0 0.0
        %745 = vmatprep.subr.mxu0 0.0
        %746 = vmatpush1.msra.mxu0 0.0
        %747 = vmatprep.subr.mxu0 0.0
        %748 = vmatpush1.msra.mxu0 0.0
        %749 = vmatprep.mubr.f32.mxu0 0.0
        %750 = vmatmul.mubr.f32.gmra.mrb[0].mxu0 %v400
        %v751 = vpop.f32.mrb[0].mxu0
        %v752 = vadd.f32 0.0, %v751
        %v753 = vpop.f32.mrb[0].mxu0
        %754 = vdwg.mxu0
        %s755 = scalar_lea.vmem %s269, 24 [#allocation8]
        %756 = vst [vmem:[%s755] sm:$0xff] %v752
        %s757 = sand.u32 %s125, 1
        %s758 = scalar_lea.sflag [#allocation4], %s757
        %s759 = sand.u32 %s125, 1
        %s760 = smul.addr %s759, 32
        %s761 = scalar_lea.vmem [#allocation8], %s760
        // Predicated region
        $region45: #{tpu_custom_call.1} parent=31 // pred_check
          %p762 = pneg %p135
        $region46: #{tpu_custom_call.1} parent=31 // pred_check_branch
          %764 = sbr.rel (%p762) target = $region48
        $region47: #{tpu_custom_call.1} parent=31 // pred_region
          %s765 = smul.u32 4, %s28
          %s767 = ssub.s32 512, 512
          %768 = vsyncadd %s758, %s767
          %s769 = smul.addr %s27, 4
          %s770 = sadd.s32 %s765, %s769
          %s771 = smul.addr %s770, 128
          %s772 = scalar_lea.hbm %s3, %s771
          %s773 = sshll.u32 %s761, 4
          %s774 = int_to_ptr.vmem [resolvable:$true] %s773
          %779 = dma.vmem_to_hbm [thread:$0]  %s774, 512, %s772, %s758, 128, 128, 8
        $region48: #{tpu_custom_call.1} parent=31 // pred_fallthru
          _
      $region32: #{tpu_custom_call.1} parent=5 // pred_fallthru
        _
      %p780 = scmp.le.s32.totalorder 2, %s18
      // Predicated region
      $region49: #{tpu_custom_call.1} parent=5 // pred_check
        %p781 = pneg %p780
      $region50: #{tpu_custom_call.1} parent=5 // pred_check_branch
        %783 = sbr.rel (%p781) target = $region52
      $region51: #{tpu_custom_call.1} parent=5 // pred_region
        %s784 = ssub.s32 %s18, 2
        // Predicated region
        $region53: #{tpu_custom_call.1} parent=51 // pred_check
          %p785 = pneg %p141
        $region54: #{tpu_custom_call.1} parent=51 // pred_check_branch
          %787 = sbr.rel (%p785) target = $region56
        $region55: #{tpu_custom_call.1} parent=51 // pred_region
          %s788 = sand.u32 %s126, 1
          %s789 = scalar_lea.sflag [#allocation4], %s788
          %s790 = sand.u32 %s126, 1
          %s791 = smul.addr %s790, 32
          %s792 = scalar_lea.vmem [#allocation8], %s791
          %793 = dma.done %s789, 512
        $region56: #{tpu_custom_call.1} parent=51 // pred_fallthru
          _
      $region52: #{tpu_custom_call.1} parent=5 // pred_fallthru
        _
    $region6: #{tpu_custom_call.1} parent=1 // loop_footer
      %s22 = sadd.s32 1, %s18
    $region7: #{tpu_custom_call.1} parent=1 // loop_footer_branch
      %17 = sbr.rel target = $region3
    $region8: #{tpu_custom_call.1} parent=1 // loop_exit
      _
    %794 = vsyncpa [#allocation3], 1
    %s795 = scalar_lea.sflag [#allocation3], 1
    %796 = vsyncpa %s795, 1
    %797 = vsyncpa [#allocation6], 1
    %s798 = scalar_lea.sflag [#allocation6], 1
    %799 = vsyncpa %s798, 1
    %800 = vsyncpa [#allocation4], 1
    %s801 = scalar_lea.sflag [#allocation4], 1
    %802 = vsyncpa %s801, 1

</llo_original>
